<compile_context>
chip_gen: v7x
topology: tpu7x:2x2x1
jax: 0.10.0
libtpu: 0.0.40
codegen_flags: <defaults>
</compile_context>

<pallas_src>
import jax
import jax.numpy as jnp
from jax.experimental import pallas as pl
from jax.experimental.pallas import tpu as pltpu


def _make_conv1x1_kernel(tn, cast_bf16):
    def kernel(w_ref, x_ref, o_ref):
        # w_ref: (TCo, C_in); x_ref: (TN, C_in, THW); o_ref: (TN, TCo, THW)
        w = w_ref[...]
        if cast_bf16:
            w = w.astype(jnp.bfloat16)
        # Static unrolled loop over the images in this block; each dot keeps the
        # HW tile in the lane (last) dim so output stores are unmasked full-lane.
        for i in range(tn):
            xi = x_ref[i]
            if cast_bf16:
                xi = xi.astype(jnp.bfloat16)
            o_ref[i] = jnp.dot(
                w, xi, preferred_element_type=jnp.float32
            ).astype(o_ref.dtype)

    return kernel


def _round_down(x, m):
    return (x // m) * m


def conv1x1(x_nchw, weight, *, allow_bf16_mxu=True):
    """1x1 conv, stride 1, no bias (matches nn.Conv2d(in, out, 1, bias=False)).

    x_nchw: (N, C_in, H, W)
    weight: (C_out, C_in, 1, 1)   -- same layout as the nn.Conv2d weight
    returns (N, C_out, H, W)
    """
    N, C_in, H, W = x_nchw.shape
    C_out = weight.shape[0]
    HW = H * W
    dtype = x_nchw.dtype
    dsize = jnp.dtype(dtype).itemsize

    # Free views (no data movement): keep NCHW ordering throughout.
    x3 = x_nchw.reshape(N, C_in, HW)
    w_mat = weight.reshape(C_out, C_in)

    # ---- Per-generation VMEM budget -----------------------------------------
    try:
        vmem_phys = int(pltpu.get_tpu_info().vmem_capacity_bytes)
    except Exception:
        vmem_phys = 64 * 1024 * 1024  # conservative fallback (v7x-sized)
    if vmem_phys <= 64 * 1024 * 1024:        # v7x: 64 MiB physical per TC
        ws_budget = 24 * 1024 * 1024
        vmem_limit = 40 * 1024 * 1024
    else:                                     # v5e / v6e: 128 MiB physical
        ws_budget = 32 * 1024 * 1024
        vmem_limit = 48 * 1024 * 1024

    # ---- C_out tiling (only when the weight itself is large) ----------------
    sub_mult = max(8, 32 // dsize)            # sublane multiple for this dtype
    w_bytes = C_out * C_in * dsize
    if w_bytes > 8 * 1024 * 1024 and C_out > sub_mult:
        tco = _round_down((4 * 1024 * 1024) // (C_in * dsize), sub_mult)
        tco = max(sub_mult, tco)
        if tco >= C_out:
            tco = C_out
    else:
        tco = C_out
    n_co = pl.cdiv(C_out, tco)
    w_buf_bytes = tco * C_in * dsize * (1 if n_co == 1 else 2)
    avail = max(ws_budget - w_buf_bytes, 2 * 1024 * 1024)

    # ---- Tile sizes: TN images x THW spatial columns per grid step ----------
    if HW <= 1024:
        # Small feature maps: full-HW tile (legal: equals the full array dim)
        # and several images per step to amortize the per-step fixed cost.
        THW = HW
        per_img = 2 * (C_in + tco) * THW * dsize       # double-buffered x + out
        TN = max(1, min(N, 8, avail // max(per_img, 1)))
    else:
        TN = 1
        per_col = 2 * (C_in + tco) * dsize             # double-buffered x + out
        thw_cap = _round_down(32768 // dsize, 128)     # 8192 f32 / 16384 bf16
        THW = _round_down(avail // per_col, 128)
        THW = max(512, min(THW, thw_cap))
        if THW >= HW:
            THW = HW                                   # full extent always legal

    n_bt = pl.cdiv(N, TN)
    n_hw = pl.cdiv(HW, THW)

    # v7x megacore balance: if all parallel work sits on the HW axis, avoid an
    # odd tile count (one TC would otherwise trail on the masked tail tile).
    if n_bt == 1 and n_hw > 1 and (n_hw % 2 == 1) and THW < HW:
        thw2 = pl.cdiv(pl.cdiv(HW, n_hw + 1), 128) * 128
        if thw2 >= 128:
            THW = min(thw2, HW)
            n_hw = pl.cdiv(HW, THW)

    # Raise the scoped limit on the big-VMEM generations if the working set needs it.
    ws_bytes = 2 * TN * (C_in + tco) * THW * dsize + w_buf_bytes
    if vmem_phys > 64 * 1024 * 1024 and ws_bytes > 40 * 1024 * 1024:
        vmem_limit = 96 * 1024 * 1024

    # ---- Grid ordering: larger parallel axis leads (megacore); C_out tiles
    # innermost so the x block index is constant across them (no x re-DMA). ----
    if n_bt >= n_hw:
        grid = (n_bt, n_hw, n_co)
        x_map = lambda b, j, c: (b, 0, j)
        w_map = lambda b, j, c: (c, 0)
        o_map = lambda b, j, c: (b, c, j)
    else:
        grid = (n_hw, n_bt, n_co)
        x_map = lambda j, b, c: (b, 0, j)
        w_map = lambda j, b, c: (c, 0)
        o_map = lambda j, b, c: (b, c, j)

    cast_bf16 = bool(
        allow_bf16_mxu and dtype == jnp.float32 and C_in >= 1024 and C_out >= 1024
    )
    kernel = _make_conv1x1_kernel(TN, cast_bf16)

    x_spec = pl.BlockSpec((TN, C_in, THW), x_map)
    out_spec = pl.BlockSpec((TN, tco, THW), o_map)

    def _call(weight_spec):
        return pl.pallas_call(
            kernel,
            out_shape=jax.ShapeDtypeStruct((N, C_out, HW), dtype),
            grid_spec=pltpu.PrefetchScalarGridSpec(
                num_scalar_prefetch=0,
                grid=grid,
                in_specs=[weight_spec, x_spec],
                out_specs=out_spec,
            ),
            compiler_params=pltpu.CompilerParams(
                dimension_semantics=("parallel", "parallel", "arbitrary"),
                vmem_limit_bytes=vmem_limit,
            ),
        )(w_mat, x3)

    if n_co == 1:
        # Constant weight index -> single buffer halves its VMEM footprint.
        try:
            out3 = _call(
                pl.BlockSpec((tco, C_in), w_map, pipeline_mode=pl.Buffered(1))
            )
        except Exception:
            # Fallback for jax versions without single-buffer pipeline_mode.
            out3 = _call(pl.BlockSpec((tco, C_in), w_map))
    else:
        out3 = _call(pl.BlockSpec((tco, C_in), w_map))

    return out3.reshape(N, C_out, H, W)


if __name__ == "__main__":
    key = jax.random.PRNGKey(0)
    k_x, k_w = jax.random.split(key)

    N, C_in, H, W = 2, 4, 16, 16
    C_out = 8

    x = jax.random.normal(k_x, (N, C_in, H, W), dtype=jnp.float32)
    # nn.Conv2d weight shape (C_out, C_in, 1, 1).
    weight = jax.random.normal(k_w, (C_out, C_in, 1, 1), dtype=jnp.float32) * 0.1

    out = conv1x1(x, weight)
    jax.block_until_ready(out)

    # Cross-check against a pure-JAX reference of the same conv.
    ref = jnp.einsum("nchw,oc->nohw", x, weight[:, :, 0, 0])
    assert out.shape == (N, C_out, H, W)
    assert jnp.allclose(out, ref, atol=1e-5, rtol=1e-5)

    print("KERNEL_OK")
</pallas_src>

<mosaic_0001>
module attributes {stable_mosaic.version = 11 : i64} {
  func.func @kernel(%arg0: i32, %arg1: i32, %arg2: i32, %arg3: memref<8x4xf32, #tpu.memory_space<vmem>>, %arg4: memref<2x4x256xf32, #tpu.memory_space<vmem>>, %arg5: memref<2x8x256xf32, #tpu.memory_space<vmem>>) attributes {dimension_semantics = [#tpu.dimension_semantics<parallel>, #tpu.dimension_semantics<parallel>, #tpu.dimension_semantics<arbitrary>], iteration_bounds = array<i64: 1, 1, 1>, scalar_prefetch = 0 : i64, scratch_operands = 0 : i64, tpu.core_type = #tpu.core_type<tc>, window_params = [{pipeline_mode = #tpu.pipeline_mode<synchronous>, transform_indices = @transform_0, window_bounds = array<i64: 8, 4>}, {transform_indices = @transform_1, window_bounds = array<i64: 2, 4, 256>}, {transform_indices = @transform_2, window_bounds = array<i64: 2, 8, 256>}]} {
    %c0 = arith.constant 0 : index
    %c0_0 = arith.constant 0 : index
    %0 = vector.load %arg3[%c0, %c0_0] : memref<8x4xf32, #tpu.memory_space<vmem>>, vector<8x4xf32>
    %c0_1 = arith.constant 0 : index
    %c0_2 = arith.constant 0 : index
    %c0_3 = arith.constant 0 : index
    %1 = vector.load %arg4[%c0_1, %c0_2, %c0_3] : memref<2x4x256xf32, #tpu.memory_space<vmem>>, vector<1x4x256xf32>
    %2 = vector.shape_cast %1 : vector<1x4x256xf32> to vector<4x256xf32>
    %cst = arith.constant dense<0.000000e+00> : vector<8x256xf32>
    %3 = tpu.matmul %0, %2, %cst {dimension_numbers = #tpu.dot_dimension_numbers<[1], [0], [0], [1], [0, 0, 1, 1], [], []>} : vector<8x4xf32>, vector<4x256xf32>, vector<8x256xf32> -> vector<8x256xf32>
    %c0_4 = arith.constant 0 : index
    %c0_5 = arith.constant 0 : index
    %c0_6 = arith.constant 0 : index
    %4 = vector.load %arg5[%c0_4, %c0_5, %c0_6] : memref<2x8x256xf32, #tpu.memory_space<vmem>>, vector<1x8x256xf32>
    %5 = vector.shape_cast %4 : vector<1x8x256xf32> to vector<8x256xf32>
    %6 = vector.shape_cast %3 : vector<8x256xf32> to vector<1x8x256xf32>
    tpu.vector_store %arg5[%c0_4, %c0_5, %c0_6], %6 {strides = array<i32>} : memref<2x8x256xf32, #tpu.memory_space<vmem>>, vector<1x8x256xf32>,
    %c1 = arith.constant 1 : index
    %c0_7 = arith.constant 0 : index
    %c0_8 = arith.constant 0 : index
    %7 = vector.load %arg4[%c1, %c0_7, %c0_8] : memref<2x4x256xf32, #tpu.memory_space<vmem>>, vector<1x4x256xf32>
    %8 = vector.shape_cast %7 : vector<1x4x256xf32> to vector<4x256xf32>
    %cst_9 = arith.constant dense<0.000000e+00> : vector<8x256xf32>
    %9 = tpu.matmul %0, %8, %cst_9 {dimension_numbers = #tpu.dot_dimension_numbers<[1], [0], [0], [1], [0, 0, 1, 1], [], []>} : vector<8x4xf32>, vector<4x256xf32>, vector<8x256xf32> -> vector<8x256xf32>
    %c1_10 = arith.constant 1 : index
    %c0_11 = arith.constant 0 : index
    %c0_12 = arith.constant 0 : index
    %10 = vector.load %arg5[%c1_10, %c0_11, %c0_12] : memref<2x8x256xf32, #tpu.memory_space<vmem>>, vector<1x8x256xf32>
    %11 = vector.shape_cast %10 : vector<1x8x256xf32> to vector<8x256xf32>
    %12 = vector.shape_cast %9 : vector<8x256xf32> to vector<1x8x256xf32>
    tpu.vector_store %arg5[%c1_10, %c0_11, %c0_12], %12 {strides = array<i32>} : memref<2x8x256xf32, #tpu.memory_space<vmem>>, vector<1x8x256xf32>,
    return
  }
  func.func @transform_0(%arg0: i32, %arg1: i32, %arg2: i32) -> (i32, i32) {
    %c0_i32 = arith.constant 0 : i32
    %c0_i32_0 = arith.constant 0 : i32
    return %arg2, %c0_i32 : i32, i32
  }
  func.func @transform_1(%arg0: i32, %arg1: i32, %arg2: i32) -> (i32, i32, i32) {
    %c0_i32 = arith.constant 0 : i32
    %c0_i32_0 = arith.constant 0 : i32
    return %arg0, %c0_i32, %arg1 : i32, i32, i32
  }
  func.func @transform_2(%arg0: i32, %arg1: i32, %arg2: i32) -> (i32, i32, i32) {
    %c0_i32 = arith.constant 0 : i32
    return %arg0, %arg2, %arg1 : i32, i32, i32
  }
}

module attributes {stable_mosaic.version = 11 : i64} {
  func.func @kernel(%arg0: i32, %arg1: i32, %arg2: i32, %arg3: memref<8x4xf32, #tpu.memory_space<vmem>>, %arg4: memref<2x4x256xf32, #tpu.memory_space<vmem>>, %arg5: memref<2x8x256xf32, #tpu.memory_space<vmem>>) attributes {dimension_semantics = [#tpu.dimension_semantics<parallel>, #tpu.dimension_semantics<parallel>, #tpu.dimension_semantics<arbitrary>], iteration_bounds = array<i64: 1, 1, 1>, scalar_prefetch = 0 : i64, scratch_operands = 0 : i64, tpu.core_type = #tpu.core_type<tc>, window_params = [{transform_indices = @transform_0, window_bounds = array<i64: 8, 4>}, {transform_indices = @transform_1, window_bounds = array<i64: 2, 4, 256>}, {transform_indices = @transform_2, window_bounds = array<i64: 2, 8, 256>}]} {
    %c0 = arith.constant 0 : index
    %c0_0 = arith.constant 0 : index
    %0 = vector.load %arg3[%c0, %c0_0] : memref<8x4xf32, #tpu.memory_space<vmem>>, vector<8x4xf32>
    %c0_1 = arith.constant 0 : index
    %c0_2 = arith.constant 0 : index
    %c0_3 = arith.constant 0 : index
    %1 = vector.load %arg4[%c0_1, %c0_2, %c0_3] : memref<2x4x256xf32, #tpu.memory_space<vmem>>, vector<1x4x256xf32>
    %2 = vector.shape_cast %1 : vector<1x4x256xf32> to vector<4x256xf32>
    %cst = arith.constant dense<0.000000e+00> : vector<8x256xf32>
    %3 = tpu.matmul %0, %2, %cst {dimension_numbers = #tpu.dot_dimension_numbers<[1], [0], [0], [1], [0, 0, 1, 1], [], []>} : vector<8x4xf32>, vector<4x256xf32>, vector<8x256xf32> -> vector<8x256xf32>
    %c0_4 = arith.constant 0 : index
    %c0_5 = arith.constant 0 : index
    %c0_6 = arith.constant 0 : index
    %4 = vector.load %arg5[%c0_4, %c0_5, %c0_6] : memref<2x8x256xf32, #tpu.memory_space<vmem>>, vector<1x8x256xf32>
    %5 = vector.shape_cast %4 : vector<1x8x256xf32> to vector<8x256xf32>
    %6 = vector.shape_cast %3 : vector<8x256xf32> to vector<1x8x256xf32>
    tpu.vector_store %arg5[%c0_4, %c0_5, %c0_6], %6 {strides = array<i32>} : memref<2x8x256xf32, #tpu.memory_space<vmem>>, vector<1x8x256xf32>,
    %c1 = arith.constant 1 : index
    %c0_7 = arith.constant 0 : index
    %c0_8 = arith.constant 0 : index
    %7 = vector.load %arg4[%c1, %c0_7, %c0_8] : memref<2x4x256xf32, #tpu.memory_space<vmem>>, vector<1x4x256xf32>
    %8 = vector.shape_cast %7 : vector<1x4x256xf32> to vector<4x256xf32>
    %cst_9 = arith.constant dense<0.000000e+00> : vector<8x256xf32>
    %9 = tpu.matmul %0, %8, %cst_9 {dimension_numbers = #tpu.dot_dimension_numbers<[1], [0], [0], [1], [0, 0, 1, 1], [], []>} : vector<8x4xf32>, vector<4x256xf32>, vector<8x256xf32> -> vector<8x256xf32>
    %c1_10 = arith.constant 1 : index
    %c0_11 = arith.constant 0 : index
    %c0_12 = arith.constant 0 : index
    %10 = vector.load %arg5[%c1_10, %c0_11, %c0_12] : memref<2x8x256xf32, #tpu.memory_space<vmem>>, vector<1x8x256xf32>
    %11 = vector.shape_cast %10 : vector<1x8x256xf32> to vector<8x256xf32>
    %12 = vector.shape_cast %9 : vector<8x256xf32> to vector<1x8x256xf32>
    tpu.vector_store %arg5[%c1_10, %c0_11, %c0_12], %12 {strides = array<i32>} : memref<2x8x256xf32, #tpu.memory_space<vmem>>, vector<1x8x256xf32>,
    return
  }
  func.func @transform_0(%arg0: i32, %arg1: i32, %arg2: i32) -> (i32, i32) {
    %c0_i32 = arith.constant 0 : i32
    %c0_i32_0 = arith.constant 0 : i32
    return %arg2, %c0_i32 : i32, i32
  }
  func.func @transform_1(%arg0: i32, %arg1: i32, %arg2: i32) -> (i32, i32, i32) {
    %c0_i32 = arith.constant 0 : i32
    %c0_i32_0 = arith.constant 0 : i32
    return %arg0, %c0_i32, %arg1 : i32, i32, i32
  }
  func.func @transform_2(%arg0: i32, %arg1: i32, %arg2: i32) -> (i32, i32, i32) {
    %c0_i32 = arith.constant 0 : i32
    return %arg0, %arg2, %arg1 : i32, i32, i32
  }
}

</mosaic_0001>

<llo_original>
// kernel: tpu_custom_call.1
$region0: #{tpu_custom_call.1}
  #allocation0 [shape = 'u32[]', space=smem, size = 0x4, offset = 0x4, fixed_abs, tag = 'smem constant byte address 0x4 - core index']
  #allocation1 [shape = 'u32[144,128]{1,0:T(1,128)}', space=vmem, size = 0x12000, scoped, tag = 'internal scratch']
  %s0 = inlined_call_operand.vmem [shape: f32[8,4], index: 0, kind: input, shape index: {}]
  %s1 = inlined_call_operand.hbm [shape: f32[2,4,256], index: 1, kind: input, shape index: {}]
  %s2 = inlined_call_operand.hbm [shape: f32[2,8,256], index: 2, kind: output, shape index: {}]
  %s3 = sld [smem:[#allocation0]]
  $region22: #{tpu_custom_call.1} parent=0
    _
  %s5 = ssub.s32 1, %s3
  %s6 = scalar_select 0, %s5, %s3
  $region1: #{tpu_custom_call.1} parent=0
    #allocation2 [shape = 'u8[8192]{0}', space=vmem, size = 0x2000, scoped, tag = 'input window, operand 1, single buffered']
    #allocation3 [shape = 's32[1]{0}', space=sflag, size = 0x4, scoped, tag = 'scoped memory for tpu_custom_call.1']
    #allocation4 [shape = 's32[1]{0}', space=sflag, size = 0x4, scoped, tag = 'scoped memory for tpu_custom_call.1']
    #allocation5 [shape = 'u8[16384]{0}', space=vmem, size = 0x4000, scoped, tag = 'output window, operand 0, single buffered']
    %7 = vsyncpa [#allocation3], 0
    %8 = vsyncpa [#allocation4], 0
    // Predicated region
    $region2: #{tpu_custom_call.1} parent=1 // pred_check
      _
    $region3: #{tpu_custom_call.1} parent=1 // pred_check_branch
      %10 = sbr.rel (0) target = $region5
    $region4: #{tpu_custom_call.1} parent=1 // pred_region
      _
    $region5: #{tpu_custom_call.1} parent=1 // pred_fallthru
      _
    // Predicated region
    $region6: #{tpu_custom_call.1} parent=1 // pred_check
      _
    $region7: #{tpu_custom_call.1} parent=1 // pred_check_branch
      %12 = sbr.rel (0) target = $region9
    $region8: #{tpu_custom_call.1} parent=1 // pred_region
      %s14 = ssub.s32 256, 256
      %15 = vsyncadd [#allocation3], %s14
      %s16 = sshll.u32 [#allocation2], 4
      %s17 = int_to_ptr.vmem [resolvable:$true] %s16
      %22 = dma.hbm_to_vmem [thread:$0]  %s1, 256, %s17, [#allocation3], 128, 128, 8
    $region9: #{tpu_custom_call.1} parent=1 // pred_fallthru
      _
    // Predicated region
    $region10: #{tpu_custom_call.1} parent=1 // pred_check
      _
    $region11: #{tpu_custom_call.1} parent=1 // pred_check_branch
      %24 = sbr.rel (0) target = $region13
    $region12: #{tpu_custom_call.1} parent=1 // pred_region
      %25 = dma.done [#allocation3], 256
    $region13: #{tpu_custom_call.1} parent=1 // pred_fallthru
      _
    %v26 = vld [vmem:[%s0] sm:$0xff]
    %v27 = vld [vmem:[#allocation2] sm:$0xff]
    %v29 = vcombine.high %v27, %v27
    %vm30 = vcmask 31744
    %v32 = vsel %vm30, %v26, 0
    %vm34 = vcmask 1043456
    %v35 = vsel %vm34, %v27, 0
    %v37 = vsel %vm34, %v29, 0
    %39 = vmatprep.subr.mxu0 %v37
    %40 = vmatpush1.msra.mxu0 %v35
    %41 = vmatprep.subr.mxu0 0.0
    %42 = vmatpush1.msra.mxu0 0.0
    %43 = vmatprep.subr.mxu0 0.0
    %44 = vmatpush1.msra.mxu0 0.0
    %45 = vmatprep.subr.mxu0 0.0
    %46 = vmatpush1.msra.mxu0 0.0
    %47 = vmatprep.subr.mxu0 0.0
    %48 = vmatpush1.msra.mxu0 0.0
    %49 = vmatprep.subr.mxu0 0.0
    %50 = vmatpush1.msra.mxu0 0.0
    %51 = vmatprep.subr.mxu0 0.0
    %52 = vmatpush1.msra.mxu0 0.0
    %53 = vmatprep.subr.mxu0 0.0
    %54 = vmatpush1.msra.mxu0 0.0
    %55 = vmatprep.subr.mxu0 0.0
    %56 = vmatpush1.msra.mxu0 0.0
    %57 = vmatprep.subr.mxu0 0.0
    %58 = vmatpush1.msra.mxu0 0.0
    %59 = vmatprep.subr.mxu0 0.0
    %60 = vmatpush1.msra.mxu0 0.0
    %61 = vmatprep.subr.mxu0 0.0
    %62 = vmatpush1.msra.mxu0 0.0
    %63 = vmatprep.subr.mxu0 0.0
    %64 = vmatpush1.msra.mxu0 0.0
    %65 = vmatprep.subr.mxu0 0.0
    %66 = vmatpush1.msra.mxu0 0.0
    %67 = vmatprep.subr.mxu0 0.0
    %68 = vmatpush1.msra.mxu0 0.0
    %69 = vmatprep.subr.mxu0 0.0
    %70 = vmatpush1.msra.mxu0 0.0
    %71 = vmatprep.subr.mxu0 0.0
    %72 = vmatpush1.msra.mxu0 0.0
    %73 = vmatprep.subr.mxu0 0.0
    %74 = vmatpush1.msra.mxu0 0.0
    %75 = vmatprep.subr.mxu0 0.0
    %76 = vmatpush1.msra.mxu0 0.0
    %77 = vmatprep.subr.mxu0 0.0
    %78 = vmatpush1.msra.mxu0 0.0
    %79 = vmatprep.subr.mxu0 0.0
    %80 = vmatpush1.msra.mxu0 0.0
    %81 = vmatprep.subr.mxu0 0.0
    %82 = vmatpush1.msra.mxu0 0.0
    %83 = vmatprep.subr.mxu0 0.0
    %84 = vmatpush1.msra.mxu0 0.0
    %85 = vmatprep.subr.mxu0 0.0
    %86 = vmatpush1.msra.mxu0 0.0
    %87 = vmatprep.subr.mxu0 0.0
    %88 = vmatpush1.msra.mxu0 0.0
    %89 = vmatprep.subr.mxu0 0.0
    %90 = vmatpush1.msra.mxu0 0.0
    %91 = vmatprep.subr.mxu0 0.0
    %92 = vmatpush1.msra.mxu0 0.0
    %93 = vmatprep.subr.mxu0 0.0
    %94 = vmatpush1.msra.mxu0 0.0
    %95 = vmatprep.subr.mxu0 0.0
    %96 = vmatpush1.msra.mxu0 0.0
    %97 = vmatprep.subr.mxu0 0.0
    %98 = vmatpush1.msra.mxu0 0.0
    %99 = vmatprep.subr.mxu0 0.0
    %100 = vmatpush1.msra.mxu0 0.0
    %101 = vmatprep.subr.mxu0 0.0
    %102 = vmatpush1.msra.mxu0 0.0
    %103 = vmatprep.mubr.f32.mxu0 0.0
    %104 = vmatmul.mubr.f32.gmra.mrb[0].mxu0 %v32
    %v105 = vpop.f32.mrb[0].mxu0
    %v106 = vadd.f32 0.0, %v105
    %v107 = vpop.f32.mrb[0].mxu0
    %v108 = vadd.f32 0.0, %v107
    %109 = vdwg.mxu0
    %110 = vst [vmem:[#allocation5] sm:$0xff] %v106
    %111 = vst [vmem:[#allocation5 + $0x8] sm:$0xff] %v108
    %s112 = scalar_lea.vmem [#allocation2], 8
    %v113 = vld [vmem:[%s112] sm:$0xff]
    %v115 = vcombine.high %v113, %v113
    %v116 = vsel %vm34, %v113, 0
    %v118 = vsel %vm34, %v115, 0
    %120 = vmatprep.subr.mxu0 %v118
    %121 = vmatpush1.msra.mxu0 %v116
    %122 = vmatprep.subr.mxu0 0.0
    %123 = vmatpush1.msra.mxu0 0.0
    %124 = vmatprep.subr.mxu0 0.0
    %125 = vmatpush1.msra.mxu0 0.0
    %126 = vmatprep.subr.mxu0 0.0
    %127 = vmatpush1.msra.mxu0 0.0
    %128 = vmatprep.subr.mxu0 0.0
    %129 = vmatpush1.msra.mxu0 0.0
    %130 = vmatprep.subr.mxu0 0.0
    %131 = vmatpush1.msra.mxu0 0.0
    %132 = vmatprep.subr.mxu0 0.0
    %133 = vmatpush1.msra.mxu0 0.0
    %134 = vmatprep.subr.mxu0 0.0
    %135 = vmatpush1.msra.mxu0 0.0
    %136 = vmatprep.subr.mxu0 0.0
    %137 = vmatpush1.msra.mxu0 0.0
    %138 = vmatprep.subr.mxu0 0.0
    %139 = vmatpush1.msra.mxu0 0.0
    %140 = vmatprep.subr.mxu0 0.0
    %141 = vmatpush1.msra.mxu0 0.0
    %142 = vmatprep.subr.mxu0 0.0
    %143 = vmatpush1.msra.mxu0 0.0
    %144 = vmatprep.subr.mxu0 0.0
    %145 = vmatpush1.msra.mxu0 0.0
    %146 = vmatprep.subr.mxu0 0.0
    %147 = vmatpush1.msra.mxu0 0.0
    %148 = vmatprep.subr.mxu0 0.0
    %149 = vmatpush1.msra.mxu0 0.0
    %150 = vmatprep.subr.mxu0 0.0
    %151 = vmatpush1.msra.mxu0 0.0
    %152 = vmatprep.subr.mxu0 0.0
    %153 = vmatpush1.msra.mxu0 0.0
    %154 = vmatprep.subr.mxu0 0.0
    %155 = vmatpush1.msra.mxu0 0.0
    %156 = vmatprep.subr.mxu0 0.0
    %157 = vmatpush1.msra.mxu0 0.0
    %158 = vmatprep.subr.mxu0 0.0
    %159 = vmatpush1.msra.mxu0 0.0
    %160 = vmatprep.subr.mxu0 0.0
    %161 = vmatpush1.msra.mxu0 0.0
    %162 = vmatprep.subr.mxu0 0.0
    %163 = vmatpush1.msra.mxu0 0.0
    %164 = vmatprep.subr.mxu0 0.0
    %165 = vmatpush1.msra.mxu0 0.0
    %166 = vmatprep.subr.mxu0 0.0
    %167 = vmatpush1.msra.mxu0 0.0
    %168 = vmatprep.subr.mxu0 0.0
    %169 = vmatpush1.msra.mxu0 0.0
    %170 = vmatprep.subr.mxu0 0.0
    %171 = vmatpush1.msra.mxu0 0.0
    %172 = vmatprep.subr.mxu0 0.0
    %173 = vmatpush1.msra.mxu0 0.0
    %174 = vmatprep.subr.mxu0 0.0
    %175 = vmatpush1.msra.mxu0 0.0
    %176 = vmatprep.subr.mxu0 0.0
    %177 = vmatpush1.msra.mxu0 0.0
    %178 = vmatprep.subr.mxu0 0.0
    %179 = vmatpush1.msra.mxu0 0.0
    %180 = vmatprep.subr.mxu0 0.0
    %181 = vmatpush1.msra.mxu0 0.0
    %182 = vmatprep.subr.mxu0 0.0
    %183 = vmatpush1.msra.mxu0 0.0
    %184 = vmatprep.mubr.f32.mxu0 0.0
    %185 = vmatmul.mubr.f32.gmra.mrb[0].mxu0 %v32
    %v186 = vpop.f32.mrb[0].mxu0
    %v187 = vadd.f32 0.0, %v186
    %v188 = vpop.f32.mrb[0].mxu0
    %v189 = vadd.f32 0.0, %v188
    %190 = vdwg.mxu0
    %s191 = scalar_lea.vmem [#allocation5], 16
    %192 = vst [vmem:[%s191] sm:$0xff] %v187
    %193 = vst [vmem:[%s191 + $0x8] sm:$0xff] %v189
    // Predicated region
    $region14: #{tpu_custom_call.1} parent=1 // pred_check
      _
    $region15: #{tpu_custom_call.1} parent=1 // pred_check_branch
      %195 = sbr.rel (0) target = $region17
    $region16: #{tpu_custom_call.1} parent=1 // pred_region
      %s197 = ssub.s32 512, 512
      %198 = vsyncadd [#allocation4], %s197
      %s199 = sshll.u32 [#allocation5], 4
      %s200 = int_to_ptr.vmem [resolvable:$true] %s199
      %205 = dma.vmem_to_hbm [thread:$0]  %s200, 512, %s2, [#allocation4], 256, 256, 16
    $region17: #{tpu_custom_call.1} parent=1 // pred_fallthru
      _
    // Predicated region
    $region18: #{tpu_custom_call.1} parent=1 // pred_check
      _
    $region19: #{tpu_custom_call.1} parent=1 // pred_check_branch
      %207 = sbr.rel (0) target = $region21
    $region20: #{tpu_custom_call.1} parent=1 // pred_region
      %208 = dma.done [#allocation4], 512
    $region21: #{tpu_custom_call.1} parent=1 // pred_fallthru
      _
    %209 = vsyncpa [#allocation3], 1
    %210 = vsyncpa [#allocation4], 1

// kernel: tpu_custom_call.1
$region0: #{tpu_custom_call.1}
  #allocation0 [shape = 'u32[]', space=smem, size = 0x4, offset = 0x4, fixed_abs, tag = 'smem constant byte address 0x4 - core index']
  #allocation1 [shape = 'u32[144,128]{1,0:T(1,128)}', space=vmem, size = 0x12000, scoped, tag = 'internal scratch']
  %s0 = inlined_call_operand.vmem [shape: f32[8,4], index: 0, kind: input, shape index: {}]
  %s1 = inlined_call_operand.hbm [shape: f32[2,4,256], index: 1, kind: input, shape index: {}]
  %s2 = inlined_call_operand.hbm [shape: f32[2,8,256], index: 2, kind: output, shape index: {}]
  %s3 = sld [smem:[#allocation0]]
  $region22: #{tpu_custom_call.1} parent=0
    _
  %s5 = ssub.s32 1, %s3
  %s6 = scalar_select 0, %s5, %s3
  $region1: #{tpu_custom_call.1} parent=0
    #allocation2 [shape = 'u8[8192]{0}', space=vmem, size = 0x2000, scoped, tag = 'input window, operand 1, single buffered']
    #allocation3 [shape = 's32[1]{0}', space=sflag, size = 0x4, scoped, tag = 'scoped memory for tpu_custom_call.1']
    #allocation4 [shape = 's32[1]{0}', space=sflag, size = 0x4, scoped, tag = 'scoped memory for tpu_custom_call.1']
    #allocation5 [shape = 'u8[16384]{0}', space=vmem, size = 0x4000, scoped, tag = 'output window, operand 0, single buffered']
    %7 = vsyncpa [#allocation3], 0
    %8 = vsyncpa [#allocation4], 0
    // Predicated region
    $region2: #{tpu_custom_call.1} parent=1 // pred_check
      _
    $region3: #{tpu_custom_call.1} parent=1 // pred_check_branch
      %10 = sbr.rel (0) target = $region5
    $region4: #{tpu_custom_call.1} parent=1 // pred_region
      _
    $region5: #{tpu_custom_call.1} parent=1 // pred_fallthru
      _
    // Predicated region
    $region6: #{tpu_custom_call.1} parent=1 // pred_check
      _
    $region7: #{tpu_custom_call.1} parent=1 // pred_check_branch
      %12 = sbr.rel (0) target = $region9
    $region8: #{tpu_custom_call.1} parent=1 // pred_region
      %s14 = ssub.s32 256, 256
      %15 = vsyncadd [#allocation3], %s14
      %s16 = sshll.u32 [#allocation2], 4
      %s17 = int_to_ptr.vmem [resolvable:$true] %s16
      %22 = dma.hbm_to_vmem [thread:$0]  %s1, 256, %s17, [#allocation3], 128, 128, 8
    $region9: #{tpu_custom_call.1} parent=1 // pred_fallthru
      _
    // Predicated region
    $region10: #{tpu_custom_call.1} parent=1 // pred_check
      _
    $region11: #{tpu_custom_call.1} parent=1 // pred_check_branch
      %24 = sbr.rel (0) target = $region13
    $region12: #{tpu_custom_call.1} parent=1 // pred_region
      %25 = dma.done [#allocation3], 256
    $region13: #{tpu_custom_call.1} parent=1 // pred_fallthru
      _
    %v26 = vld [vmem:[%s0] sm:$0xff]
    %v27 = vld [vmem:[#allocation2] sm:$0xff]
    %v29 = vcombine.high %v27, %v27
    %vm30 = vcmask 31744
    %v32 = vsel %vm30, %v26, 0
    %vm34 = vcmask 1043456
    %v35 = vsel %vm34, %v27, 0
    %v37 = vsel %vm34, %v29, 0
    %39 = vmatprep.subr.mxu0 %v37
    %40 = vmatpush1.msra.mxu0 %v35
    %41 = vmatprep.subr.mxu0 0.0
    %42 = vmatpush1.msra.mxu0 0.0
    %43 = vmatprep.subr.mxu0 0.0
    %44 = vmatpush1.msra.mxu0 0.0
    %45 = vmatprep.subr.mxu0 0.0
    %46 = vmatpush1.msra.mxu0 0.0
    %47 = vmatprep.subr.mxu0 0.0
    %48 = vmatpush1.msra.mxu0 0.0
    %49 = vmatprep.subr.mxu0 0.0
    %50 = vmatpush1.msra.mxu0 0.0
    %51 = vmatprep.subr.mxu0 0.0
    %52 = vmatpush1.msra.mxu0 0.0
    %53 = vmatprep.subr.mxu0 0.0
    %54 = vmatpush1.msra.mxu0 0.0
    %55 = vmatprep.subr.mxu0 0.0
    %56 = vmatpush1.msra.mxu0 0.0
    %57 = vmatprep.subr.mxu0 0.0
    %58 = vmatpush1.msra.mxu0 0.0
    %59 = vmatprep.subr.mxu0 0.0
    %60 = vmatpush1.msra.mxu0 0.0
    %61 = vmatprep.subr.mxu0 0.0
    %62 = vmatpush1.msra.mxu0 0.0
    %63 = vmatprep.subr.mxu0 0.0
    %64 = vmatpush1.msra.mxu0 0.0
    %65 = vmatprep.subr.mxu0 0.0
    %66 = vmatpush1.msra.mxu0 0.0
    %67 = vmatprep.subr.mxu0 0.0
    %68 = vmatpush1.msra.mxu0 0.0
    %69 = vmatprep.subr.mxu0 0.0
    %70 = vmatpush1.msra.mxu0 0.0
    %71 = vmatprep.subr.mxu0 0.0
    %72 = vmatpush1.msra.mxu0 0.0
    %73 = vmatprep.subr.mxu0 0.0
    %74 = vmatpush1.msra.mxu0 0.0
    %75 = vmatprep.subr.mxu0 0.0
    %76 = vmatpush1.msra.mxu0 0.0
    %77 = vmatprep.subr.mxu0 0.0
    %78 = vmatpush1.msra.mxu0 0.0
    %79 = vmatprep.subr.mxu0 0.0
    %80 = vmatpush1.msra.mxu0 0.0
    %81 = vmatprep.subr.mxu0 0.0
    %82 = vmatpush1.msra.mxu0 0.0
    %83 = vmatprep.subr.mxu0 0.0
    %84 = vmatpush1.msra.mxu0 0.0
    %85 = vmatprep.subr.mxu0 0.0
    %86 = vmatpush1.msra.mxu0 0.0
    %87 = vmatprep.subr.mxu0 0.0
    %88 = vmatpush1.msra.mxu0 0.0
    %89 = vmatprep.subr.mxu0 0.0
    %90 = vmatpush1.msra.mxu0 0.0
    %91 = vmatprep.subr.mxu0 0.0
    %92 = vmatpush1.msra.mxu0 0.0
    %93 = vmatprep.subr.mxu0 0.0
    %94 = vmatpush1.msra.mxu0 0.0
    %95 = vmatprep.subr.mxu0 0.0
    %96 = vmatpush1.msra.mxu0 0.0
    %97 = vmatprep.subr.mxu0 0.0
    %98 = vmatpush1.msra.mxu0 0.0
    %99 = vmatprep.subr.mxu0 0.0
    %100 = vmatpush1.msra.mxu0 0.0
    %101 = vmatprep.subr.mxu0 0.0
    %102 = vmatpush1.msra.mxu0 0.0
    %103 = vmatprep.mubr.f32.mxu0 0.0
    %104 = vmatmul.mubr.f32.gmra.mrb[0].mxu0 %v32
    %v105 = vpop.f32.mrb[0].mxu0
    %v106 = vadd.f32 0.0, %v105
    %v107 = vpop.f32.mrb[0].mxu0
    %v108 = vadd.f32 0.0, %v107
    %109 = vdwg.mxu0
    %110 = vst [vmem:[#allocation5] sm:$0xff] %v106
    %111 = vst [vmem:[#allocation5 + $0x8] sm:$0xff] %v108
    %s112 = scalar_lea.vmem [#allocation2], 8
    %v113 = vld [vmem:[%s112] sm:$0xff]
    %v115 = vcombine.high %v113, %v113
    %v116 = vsel %vm34, %v113, 0
    %v118 = vsel %vm34, %v115, 0
    %120 = vmatprep.subr.mxu0 %v118
    %121 = vmatpush1.msra.mxu0 %v116
    %122 = vmatprep.subr.mxu0 0.0
    %123 = vmatpush1.msra.mxu0 0.0
    %124 = vmatprep.subr.mxu0 0.0
    %125 = vmatpush1.msra.mxu0 0.0
    %126 = vmatprep.subr.mxu0 0.0
    %127 = vmatpush1.msra.mxu0 0.0
    %128 = vmatprep.subr.mxu0 0.0
    %129 = vmatpush1.msra.mxu0 0.0
    %130 = vmatprep.subr.mxu0 0.0
    %131 = vmatpush1.msra.mxu0 0.0
    %132 = vmatprep.subr.mxu0 0.0
    %133 = vmatpush1.msra.mxu0 0.0
    %134 = vmatprep.subr.mxu0 0.0
    %135 = vmatpush1.msra.mxu0 0.0
    %136 = vmatprep.subr.mxu0 0.0
    %137 = vmatpush1.msra.mxu0 0.0
    %138 = vmatprep.subr.mxu0 0.0
    %139 = vmatpush1.msra.mxu0 0.0
    %140 = vmatprep.subr.mxu0 0.0
    %141 = vmatpush1.msra.mxu0 0.0
    %142 = vmatprep.subr.mxu0 0.0
    %143 = vmatpush1.msra.mxu0 0.0
    %144 = vmatprep.subr.mxu0 0.0
    %145 = vmatpush1.msra.mxu0 0.0
    %146 = vmatprep.subr.mxu0 0.0
    %147 = vmatpush1.msra.mxu0 0.0
    %148 = vmatprep.subr.mxu0 0.0
    %149 = vmatpush1.msra.mxu0 0.0
    %150 = vmatprep.subr.mxu0 0.0
    %151 = vmatpush1.msra.mxu0 0.0
    %152 = vmatprep.subr.mxu0 0.0
    %153 = vmatpush1.msra.mxu0 0.0
    %154 = vmatprep.subr.mxu0 0.0
    %155 = vmatpush1.msra.mxu0 0.0
    %156 = vmatprep.subr.mxu0 0.0
    %157 = vmatpush1.msra.mxu0 0.0
    %158 = vmatprep.subr.mxu0 0.0
    %159 = vmatpush1.msra.mxu0 0.0
    %160 = vmatprep.subr.mxu0 0.0
    %161 = vmatpush1.msra.mxu0 0.0
    %162 = vmatprep.subr.mxu0 0.0
    %163 = vmatpush1.msra.mxu0 0.0
    %164 = vmatprep.subr.mxu0 0.0
    %165 = vmatpush1.msra.mxu0 0.0
    %166 = vmatprep.subr.mxu0 0.0
    %167 = vmatpush1.msra.mxu0 0.0
    %168 = vmatprep.subr.mxu0 0.0
    %169 = vmatpush1.msra.mxu0 0.0
    %170 = vmatprep.subr.mxu0 0.0
    %171 = vmatpush1.msra.mxu0 0.0
    %172 = vmatprep.subr.mxu0 0.0
    %173 = vmatpush1.msra.mxu0 0.0
    %174 = vmatprep.subr.mxu0 0.0
    %175 = vmatpush1.msra.mxu0 0.0
    %176 = vmatprep.subr.mxu0 0.0
    %177 = vmatpush1.msra.mxu0 0.0
    %178 = vmatprep.subr.mxu0 0.0
    %179 = vmatpush1.msra.mxu0 0.0
    %180 = vmatprep.subr.mxu0 0.0
    %181 = vmatpush1.msra.mxu0 0.0
    %182 = vmatprep.subr.mxu0 0.0
    %183 = vmatpush1.msra.mxu0 0.0
    %184 = vmatprep.mubr.f32.mxu0 0.0
    %185 = vmatmul.mubr.f32.gmra.mrb[0].mxu0 %v32
    %v186 = vpop.f32.mrb[0].mxu0
    %v187 = vadd.f32 0.0, %v186
    %v188 = vpop.f32.mrb[0].mxu0
    %v189 = vadd.f32 0.0, %v188
    %190 = vdwg.mxu0
    %s191 = scalar_lea.vmem [#allocation5], 16
    %192 = vst [vmem:[%s191] sm:$0xff] %v187
    %193 = vst [vmem:[%s191 + $0x8] sm:$0xff] %v189
    // Predicated region
    $region14: #{tpu_custom_call.1} parent=1 // pred_check
      _
    $region15: #{tpu_custom_call.1} parent=1 // pred_check_branch
      %195 = sbr.rel (0) target = $region17
    $region16: #{tpu_custom_call.1} parent=1 // pred_region
      %s197 = ssub.s32 512, 512
      %198 = vsyncadd [#allocation4], %s197
      %s199 = sshll.u32 [#allocation5], 4
      %s200 = int_to_ptr.vmem [resolvable:$true] %s199
      %205 = dma.vmem_to_hbm [thread:$0]  %s200, 512, %s2, [#allocation4], 256, 256, 16
    $region17: #{tpu_custom_call.1} parent=1 // pred_fallthru
      _
    // Predicated region
    $region18: #{tpu_custom_call.1} parent=1 // pred_check
      _
    $region19: #{tpu_custom_call.1} parent=1 // pred_check_branch
      %207 = sbr.rel (0) target = $region21
    $region20: #{tpu_custom_call.1} parent=1 // pred_region
      %208 = dma.done [#allocation4], 512
    $region21: #{tpu_custom_call.1} parent=1 // pred_fallthru
      _
    %209 = vsyncpa [#allocation3], 1
    %210 = vsyncpa [#allocation4], 1

</llo_original>
